<compile_context>
chip_gen: v6e
topology: v6e:2x2x1
jax: 0.10.0
libtpu: 0.0.40
codegen_flags: <defaults>
</compile_context>

<pallas_src>
import functools

import jax
import jax.numpy as jnp
import numpy as np
from jax.experimental import pallas as pl
from jax.experimental.pallas import tpu as pltpu

_LANES = 128


def _cdiv(a: int, b: int) -> int:
    return -(-a // b)


def _round_up(x: int, m: int) -> int:
    return _cdiv(x, m) * m


def _largest_aligned_divisor(dim: int, align: int, max_tile: int) -> int:
    """Largest multiple of `align` that divides `dim` and is <= max_tile (0 if none)."""
    best = 0
    t = align
    limit = min(dim, max_tile)
    while t <= limit:
        if dim % t == 0:
            best = t
        t += align
    return best


def _make_row_sq_sum_kernel(tm, tn, n_rows, n_cols, mask_rows, mask_cols):
    """Kernel producing per-row Σ(pred-gt)² with a lane-dense resident accumulator."""
    nchunks = tn // _LANES

    def kernel(pred_ref, gt_ref, out_ref, acc_ref):
        j = pl.program_id(1)

        @pl.when(j == 0)
        def _():
            acc_ref[...] = jnp.zeros_like(acc_ref)

        # Upcast once per tile (keeps v5e off implicit per-op bf16 paths).
        p = pred_ref[...].astype(jnp.float32)   # (tm, tn)
        g = gt_ref[...].astype(jnp.float32)     # (tm, tn)
        d = p - g
        d2 = d * d

        if mask_rows or mask_cols:
            valid = None
            if mask_rows:
                rows = jax.lax.broadcasted_iota(jnp.int32, (tm, tn), 0)
                valid = (rows + pl.program_id(0) * tm) < n_rows
            if mask_cols:
                cols = jax.lax.broadcasted_iota(jnp.int32, (tm, tn), 1)
                cvalid = (cols + j * tn) < n_cols
                valid = cvalid if valid is None else jnp.logical_and(valid, cvalid)
            d2 = jnp.where(valid, d2, 0.0)

        # Lane-dense partial accumulate: pure VPU adds over 128-lane slices;
        # the cross-lane (XLU) reduce is deferred to the last HW step.
        partial = d2[:, 0:_LANES]
        for c in range(1, nchunks):
            partial = partial + d2[:, c * _LANES:(c + 1) * _LANES]
        acc_ref[...] += partial

        @pl.when(j == pl.num_programs(1) - 1)
        def _():
            out_ref[...] = jnp.sum(acc_ref[...], axis=1, keepdims=True)

    return kernel


@functools.partial(jax.jit, static_argnames=("use_target_weight",))
def joints_mse_loss(output, target, target_weight, use_target_weight=True):
    """Pallas implementation of JointsMSELoss.forward.

    output, target:    (B, J, H, W)
    target_weight:     (B, J, 1)
    returns:           scalar float32 loss
    """
    B, J, H, W = output.shape
    HW = H * W
    R = B * J

    # Pure reshapes in the natural row-major layout — no HBM round-trip.
    pred = output.reshape(R, HW)
    gt = target.reshape(R, HW)

    # Dtype-aware tile selection (~4 MiB per input buffer; sublane alignment
    # grows for packed dtypes: 8 for f32, 16 for bf16, 32 for int8/fp8).
    itemsize = jnp.dtype(output.dtype).itemsize
    sub_align = max(8, 32 // itemsize)
    budget_elems = (4 << 20) // itemsize

    # Lane tile: prefer an exact multiple-of-128 divisor of HW, else mask.
    tn = _largest_aligned_divisor(HW, _LANES, 4096)
    mask_cols = False
    if tn == 0:
        tn = min(_round_up(HW, _LANES), 2048)
        mask_cols = (HW % tn) != 0

    # Row tile from the per-buffer byte budget (no hard 512-row cap).
    max_tm = max(sub_align, (budget_elems // tn) // sub_align * sub_align)
    tm = _largest_aligned_divisor(R, sub_align, max_tm)
    mask_rows = False
    if tm == 0:
        tm = min(_round_up(R, sub_align), max_tm)
        mask_rows = (R % tm) != 0

    # Guarantee >=2 row tiles so both v7x TensorCores get work (row axis is parallel).
    if _cdiv(R, tm) < 2 and tm > sub_align:
        tm = min(tm, _round_up(_cdiv(R, 2), sub_align))
        mask_rows = (R % tm) != 0

    grid = (_cdiv(R, tm), _cdiv(HW, tn))

    kernel = _make_row_sq_sum_kernel(tm, tn, R, HW, mask_rows, mask_cols)

    partial_rows = pl.pallas_call(
        kernel,
        out_shape=jax.ShapeDtypeStruct((R, 1), jnp.float32),
        grid_spec=pltpu.PrefetchScalarGridSpec(
            num_scalar_prefetch=0,
            grid=grid,
            in_specs=[
                pl.BlockSpec((tm, tn), lambda i, j: (i, j)),   # pred tile
                pl.BlockSpec((tm, tn), lambda i, j: (i, j)),   # gt tile
            ],
            # Per-row-tile sums, resident across the HW (reduction) axis.
            out_specs=pl.BlockSpec((tm, 1), lambda i, j: (i, 0)),
            scratch_shapes=[pltpu.VMEM((tm, _LANES), jnp.float32)],
        ),
        compiler_params=pltpu.CompilerParams(
            dimension_semantics=("parallel", "arbitrary"),
            vmem_limit_bytes=48 << 20,
        ),
        cost_estimate=pl.CostEstimate(
            flops=3 * R * HW,
            transcendentals=0,
            bytes_accessed=2 * R * HW * itemsize + R * 4,
        ),
    )(pred, gt)

    # Tiny epilogue: apply per-joint weights (w²·Σd² == Σ(w·d)²), sum, scale.
    per_joint = partial_rows.reshape(B, J)
    if use_target_weight:
        w = target_weight.reshape(B, J).astype(jnp.float32)
        total = jnp.sum(per_joint * (w * w))
    else:
        total = jnp.sum(per_joint)
    return total * (0.5 / float(B * HW * J))


def _reference_loss(output, target, target_weight, use_target_weight=True):
    # Pure-JAX reference mirroring the PyTorch loop.
    B, J, H, W = output.shape
    hp = output.reshape(B, J, -1)
    hg = target.reshape(B, J, -1)
    loss = 0.0
    for idx in range(J):
        p = hp[:, idx, :]
        g = hg[:, idx, :]
        if use_target_weight:
            wj = target_weight[:, idx]  # (B, 1)
            p = p * wj
            g = g * wj
        loss += 0.5 * jnp.mean((p - g) ** 2)
    return loss / J


if __name__ == "__main__":
    # Aligned shapes.
    B, J, H, W = 2, 4, 16, 16
    k1, k2, k3 = jax.random.split(jax.random.PRNGKey(0), 3)
    output = jax.random.normal(k1, (B, J, H, W), dtype=jnp.float32)
    target = jax.random.normal(k2, (B, J, H, W), dtype=jnp.float32)
    target_weight = jax.random.uniform(k3, (B, J, 1), dtype=jnp.float32)

    loss_w = jax.block_until_ready(
        joints_mse_loss(output, target, target_weight, use_target_weight=True))
    ref_w = _reference_loss(output, target, target_weight, use_target_weight=True)
    np.testing.assert_allclose(np.asarray(loss_w), np.asarray(ref_w), rtol=1e-5, atol=1e-6)

    loss_u = jax.block_until_ready(
        joints_mse_loss(output, target, target_weight, use_target_weight=False))
    ref_u = _reference_loss(output, target, target_weight, use_target_weight=False)
    np.testing.assert_allclose(np.asarray(loss_u), np.asarray(ref_u), rtol=1e-5, atol=1e-6)

    # Ragged shapes: exercise the cdiv-grid + in-kernel masking fallback.
    B2, J2, H2, W2 = 2, 5, 9, 15
    k4, k5, k6 = jax.random.split(jax.random.PRNGKey(1), 3)
    output2 = jax.random.normal(k4, (B2, J2, H2, W2), dtype=jnp.float32)
    target2 = jax.random.normal(k5, (B2, J2, H2, W2), dtype=jnp.float32)
    target_weight2 = jax.random.uniform(k6, (B2, J2, 1), dtype=jnp.float32)
    loss_r = jax.block_until_ready(
        joints_mse_loss(output2, target2, target_weight2, use_target_weight=True))
    ref_r = _reference_loss(output2, target2, target_weight2, use_target_weight=True)
    np.testing.assert_allclose(np.asarray(loss_r), np.asarray(ref_r), rtol=1e-5, atol=1e-6)

    print("KERNEL_OK")
</pallas_src>

<mosaic_0001>
module attributes {stable_mosaic.version = 11 : i64} {
  func.func @kernel(%arg0: i32, %arg1: i32, %arg2: memref<8x256xf32, #tpu.memory_space<vmem>>, %arg3: memref<8x256xf32, #tpu.memory_space<vmem>>, %arg4: memref<8x1xf32, #tpu.memory_space<vmem>>, %arg5: memref<8x128xf32, #tpu.memory_space<vmem>>) attributes {dimension_semantics = [#tpu.dimension_semantics<parallel>, #tpu.dimension_semantics<arbitrary>], iteration_bounds = array<i64: 1, 1>, scalar_prefetch = 0 : i64, scratch_operands = 1 : i64, tpu.core_type = #tpu.core_type<tc>, window_params = [{transform_indices = @transform_0, window_bounds = array<i64: 8, 256>}, {transform_indices = @transform_1, window_bounds = array<i64: 8, 256>}, {transform_indices = @transform_2, window_bounds = array<i64: 8, 1>}]} {
    %c0_i32 = arith.constant 0 : i32
    %0 = arith.cmpi eq, %arg1, %c0_i32 : i32
    %1 = arith.extui %0 : i1 to i32
    %c0_i32_0 = arith.constant 0 : i32
    %2 = arith.cmpi ne, %1, %c0_i32_0 : i32
    scf.if %2 {
      %cst = arith.constant 0.000000e+00 : f32
      %16 = vector.broadcast %cst : f32 to vector<8x128xf32>
      %c0_10 = arith.constant 0 : index
      %c0_11 = arith.constant 0 : index
      %17 = vector.load %arg5[%c0_10, %c0_11] : memref<8x128xf32, #tpu.memory_space<vmem>>, vector<8x128xf32>
      tpu.vector_store %arg5[%c0_10, %c0_11], %16 {strides = array<i32>} : memref<8x128xf32, #tpu.memory_space<vmem>>, vector<8x128xf32>,
    } else {
    }
    %c0 = arith.constant 0 : index
    %c0_1 = arith.constant 0 : index
    %3 = vector.load %arg2[%c0, %c0_1] : memref<8x256xf32, #tpu.memory_space<vmem>>, vector<8x256xf32>
    %c0_2 = arith.constant 0 : index
    %c0_3 = arith.constant 0 : index
    %4 = vector.load %arg3[%c0_2, %c0_3] : memref<8x256xf32, #tpu.memory_space<vmem>>, vector<8x256xf32>
    %5 = arith.subf %3, %4 : vector<8x256xf32>
    %6 = arith.mulf %5, %5 : vector<8x256xf32>
    %7 = vector.extract_strided_slice %6 {offsets = [0, 0], sizes = [8, 128], strides = [1, 1]} : vector<8x256xf32> to vector<8x128xf32>
    %8 = vector.extract_strided_slice %6 {offsets = [0, 128], sizes = [8, 128], strides = [1, 1]} : vector<8x256xf32> to vector<8x128xf32>
    %9 = arith.addf %7, %8 : vector<8x128xf32>
    %c0_4 = arith.constant 0 : index
    %c0_5 = arith.constant 0 : index
    %10 = vector.load %arg5[%c0_4, %c0_5] : memref<8x128xf32, #tpu.memory_space<vmem>>, vector<8x128xf32>
    %11 = arith.addf %10, %9 : vector<8x128xf32>
    %c0_6 = arith.constant 0 : index
    %c0_7 = arith.constant 0 : index
    %12 = vector.load %arg5[%c0_6, %c0_7] : memref<8x128xf32, #tpu.memory_space<vmem>>, vector<8x128xf32>
    tpu.vector_store %arg5[%c0_6, %c0_7], %11 {strides = array<i32>} : memref<8x128xf32, #tpu.memory_space<vmem>>, vector<8x128xf32>,
    %c0_i32_8 = arith.constant 0 : i32
    %13 = arith.cmpi eq, %arg1, %c0_i32_8 : i32
    %14 = arith.extui %13 : i1 to i32
    %c0_i32_9 = arith.constant 0 : i32
    %15 = arith.cmpi ne, %14, %c0_i32_9 : i32
    scf.if %15 {
      %c0_10 = arith.constant 0 : index
      %c0_11 = arith.constant 0 : index
      %16 = vector.load %arg5[%c0_10, %c0_11] : memref<8x128xf32, #tpu.memory_space<vmem>>, vector<8x128xf32>
      %cst = arith.constant dense<0.000000e+00> : vector<8xf32>
      %17 = vector.multi_reduction <add>, %16, %cst [1] : vector<8x128xf32> to vector<8xf32>
      %18 = vector.shape_cast %17 : vector<8xf32> to vector<8x1xf32>
      %c0_12 = arith.constant 0 : index
      %c0_13 = arith.constant 0 : index
      %19 = vector.load %arg4[%c0_12, %c0_13] : memref<8x1xf32, #tpu.memory_space<vmem>>, vector<8x1xf32>
      tpu.vector_store %arg4[%c0_12, %c0_13], %18 {strides = array<i32>} : memref<8x1xf32, #tpu.memory_space<vmem>>, vector<8x1xf32>,
    } else {
    }
    return
  }
  func.func @transform_0(%arg0: i32, %arg1: i32) -> (i32, i32) {
    %c0_i32 = arith.constant 0 : i32
    return %arg0, %arg1 : i32, i32
  }
  func.func @transform_1(%arg0: i32, %arg1: i32) -> (i32, i32) {
    %c0_i32 = arith.constant 0 : i32
    return %arg0, %arg1 : i32, i32
  }
  func.func @transform_2(%arg0: i32, %arg1: i32) -> (i32, i32) {
    %c0_i32 = arith.constant 0 : i32
    %c0_i32_0 = arith.constant 0 : i32
    return %arg0, %c0_i32 : i32, i32
  }
}

</mosaic_0001>

<llo_original>
// kernel: joints_mse_loss.1
$region0: #{joints_mse_loss.1}
  #allocation0 [shape = 'u32[]', space=smem, size = 0x4, offset = 0x4, fixed_abs, tag = 'smem constant byte address 0x4 - core index']
  #allocation1 [shape = 'u32[144,128]{1,0:T(1,128)}', space=vmem, size = 0x12000, scoped, tag = 'internal scratch']
  #allocation2 [shape = 'f32[8,128]{1,0:T(8,128)}', space=vmem, size = 0x1000, scoped, tag = 'scratch operand']
  %s0 = inlined_call_operand.vmem [shape: f32[8,256], index: 0, kind: input, shape index: {}]
  %s1 = inlined_call_operand.vmem [shape: f32[8,256], index: 1, kind: input, shape index: {}]
  %s2 = inlined_call_operand.vmem [shape: f32[8,1], index: 2, kind: output, shape index: {}]
  %s3 = sld [smem:[#allocation0]]
  $region26: #{joints_mse_loss.1} parent=0
    _
  %s5 = ssub.s32 1, %s3
  %s6 = scalar_select 0, %s5, %s3
  // Predicated region
  $region2: #{joints_mse_loss.1} parent=0 // pred_check
    _
  $region3: #{joints_mse_loss.1} parent=0 // pred_check_branch
    %8 = sbr.rel (0) target = $region5
  $region4: #{joints_mse_loss.1} parent=0 // pred_region
    _
  $region5: #{joints_mse_loss.1} parent=0 // pred_fallthru
    _
  // Predicated region
  $region6: #{joints_mse_loss.1} parent=0 // pred_check
    _
  $region7: #{joints_mse_loss.1} parent=0 // pred_check_branch
    %10 = sbr.rel (0) target = $region9
  $region8: #{joints_mse_loss.1} parent=0 // pred_region
    _
  $region9: #{joints_mse_loss.1} parent=0 // pred_fallthru
    _
  %p11 = scmp.eq.s32.totalorder 0, 0
  // Predicated region
  $region10: #{joints_mse_loss.1} parent=0 // pred_check
    %p12 = pneg %p11
  $region11: #{joints_mse_loss.1} parent=0 // pred_check_branch
    %14 = sbr.rel (%p12) target = $region13
  $region12: #{joints_mse_loss.1} parent=0 // pred_region
    %15 = vst [vmem:[#allocation2] sm:$0xff] 0.0
  $region13: #{joints_mse_loss.1} parent=0 // pred_fallthru
    _
  %v16 = vld [vmem:[%s0] sm:$0xff]
  %v17 = vld [vmem:[%s0 + $0x8] sm:$0xff]
  %v18 = vld [vmem:[%s1] sm:$0xff]
  %v19 = vld [vmem:[%s1 + $0x8] sm:$0xff]
  %v20 = vsub.f32 %v16, %v18
  %v21 = vsub.f32 %v17, %v19
  %v22 = vmul.f32 %v20, %v20
  %v23 = vmul.f32 %v21, %v21
  %v24 = vadd.f32 %v22, %v23
  %v25 = vld [vmem:[#allocation2] sm:$0xff]
  %v26 = vadd.f32 %v25, %v24
  %27 = vst [vmem:[#allocation2] sm:$0xff] %v26
  // Predicated region
  $region14: #{joints_mse_loss.1} parent=0 // pred_check
    %p28 = pneg %p11
  $region15: #{joints_mse_loss.1} parent=0 // pred_check_branch
    %30 = sbr.rel (%p28) target = $region17
  $region16: #{joints_mse_loss.1} parent=0 // pred_region
    %v31 = vld [vmem:[#allocation2] sm:$0xff]
    %32 = vadd.xlane.f32.xlu0 %v31
    %v33 = vpop.xlane.xlu0 %32
    %vm34 = vcmask 7168
    %35 = vst.msk [vmem:[%s2] sm:$0xff] %vm34, %v33
  $region17: #{joints_mse_loss.1} parent=0 // pred_fallthru
    _
  // Predicated region
  $region18: #{joints_mse_loss.1} parent=0 // pred_check
    _
  $region19: #{joints_mse_loss.1} parent=0 // pred_check_branch
    %37 = sbr.rel (0) target = $region21
  $region20: #{joints_mse_loss.1} parent=0 // pred_region
    _
  $region21: #{joints_mse_loss.1} parent=0 // pred_fallthru
    _
  // Predicated region
  $region22: #{joints_mse_loss.1} parent=0 // pred_check
    _
  $region23: #{joints_mse_loss.1} parent=0 // pred_check_branch
    %39 = sbr.rel (0) target = $region25
  $region24: #{joints_mse_loss.1} parent=0 // pred_region
    _
  $region25: #{joints_mse_loss.1} parent=0 // pred_fallthru
    _

</llo_original>
